<compile_context>
chip_gen: v6e
topology: v6e:2x2x1
jax: 0.10.0
libtpu: 0.0.40
codegen_flags: <defaults>
</compile_context>

<pallas_src>
import jax
import jax.numpy as jnp
from jax.experimental import pallas as pl
from jax.experimental.pallas import tpu as pltpu

UE_NUM = 20
IN_DIM = 18
OUT_DIM = 3
IN_FEATS = UE_NUM * IN_DIM          # 360
HIDDENS = (128, 64, 64)             # logical hidden widths (module spec)
HIDDENS_PAD = (128, 128, 128)       # zero-padded to full 128-lane tiles
OUT_FEATS = OUT_DIM * UE_NUM        # 60
BN_EPS = 1e-5
DEFAULT_TM = 2048                   # batch tile (multiple of 8)


def _round_up(x, m):
    return ((x + m - 1) // m) * m


def _choose_tm(n, tm_max=DEFAULT_TM):
    """Pick the batch tile: >= 8 rows (f32 sublane tile), <= tm_max, and prefer
    >= 2 grid steps so the parallel batch axis shards across both TCs on v7x."""
    if n <= 8:
        return 8
    half = _round_up(-(-n // 2), 8)          # ceil(n/2) rounded up to 8
    return max(8, min(tm_max, half))


def dnn_kernel(x_ref,
               w1_ref, b1_ref,
               w2_ref, b2_ref,
               w3_ref, b3_ref,
               w4_ref, b4_ref,
               o_ref):
    """Fused 4-layer MLP on one batch tile.

    x_ref is f32 (cast to bf16 here, hidden under DMA), w*_ref are bf16 MXU
    operands, b*_ref are f32; all elementwise math and accumulation stay f32.
    Dropout = identity (eval), BN folded into the weights/biases.
    """
    x = x_ref[...].astype(jnp.bfloat16)                          # (TM, 360) bf16

    h = jnp.dot(x, w1_ref[...], preferred_element_type=jnp.float32) + b1_ref[...]
    h = jnp.maximum(h, 0.0)                                      # ReLU in f32

    h = jnp.dot(h.astype(jnp.bfloat16), w2_ref[...],
                preferred_element_type=jnp.float32) + b2_ref[...]
    h = jnp.maximum(h, 0.0)

    h = jnp.dot(h.astype(jnp.bfloat16), w3_ref[...],
                preferred_element_type=jnp.float32) + b3_ref[...]
    h = jnp.maximum(h, 0.0)

    z = jnp.dot(h.astype(jnp.bfloat16), w4_ref[...],
                preferred_element_type=jnp.float32) + b4_ref[...]
    o_ref[...] = jax.nn.sigmoid(z)                               # f32, (TM, 60)


def _fold_bn(w_t, b, gamma, beta, mean, var, eps=BN_EPS):
    """Fold eval-mode BatchNorm1d into the preceding Linear (exact)."""
    scale = gamma / jnp.sqrt(var + eps)                          # (out,)
    w_folded = w_t * scale[None, :]
    b_folded = (b - mean) * scale + beta
    return w_folded, b_folded


def init_params(key):
    """Deterministic synthetic parameters matching the PyTorch module shapes.

    Returns a list of (w_bf16, b_f32) with BN folded in.  The 64-wide hidden
    layers are zero-padded to 128 (padded weight cols/rows and biases are 0, so
    results are bit-identical); the final layer keeps its true 60 columns.
    """
    real_dims = [IN_FEATS, *HIDDENS, OUT_FEATS]                  # [360,128,64,64,60]
    pad_dims = [IN_FEATS, *HIDDENS_PAD, OUT_FEATS]               # [360,128,128,128,60]
    params = []
    for li in range(4):
        fin, fout = real_dims[li], real_dims[li + 1]
        pin, pout = pad_dims[li], pad_dims[li + 1]
        key, kw, kb, kg, kbt, km, kv = jax.random.split(key, 7)
        bound = 1.0 / jnp.sqrt(jnp.float32(fin))
        w_t = jax.random.uniform(kw, (fin, fout), jnp.float32, -bound, bound)
        b = jax.random.uniform(kb, (fout,), jnp.float32, -bound, bound)
        gamma = 1.0 + 0.1 * jax.random.normal(kg, (fout,), jnp.float32)
        beta = 0.1 * jax.random.normal(kbt, (fout,), jnp.float32)
        mean = 0.1 * jax.random.normal(km, (fout,), jnp.float32)
        var = 1.0 + 0.1 * jax.random.uniform(kv, (fout,), jnp.float32)
        wf, bf = _fold_bn(w_t, b, gamma, beta, mean, var)
        wf = jnp.pad(wf, ((0, pin - fin), (0, pout - fout)))     # zero-pad hidden dims
        bf = jnp.pad(bf, ((0, pout - fout),))
        params.append((wf.astype(jnp.bfloat16),
                       bf.astype(jnp.float32).reshape(1, -1)))
    return params


def dnn_forward(x, params, tm=DEFAULT_TM):
    """x: (n, 360) f32 -> (n, 60) f32.  No wrapper-side pad/cast/slice passes."""
    n = x.shape[0]
    tm_eff = _choose_tm(n, tm)
    grid = (pl.cdiv(n, tm_eff),)                                 # ragged last tile OK

    flat_args = []
    for w, b in params:
        flat_args.extend([w, b])

    # x tile streams along the batch grid (double-buffered by Pallas);
    # weights/biases have constant block indices so they stay VMEM-resident.
    in_specs = [pl.BlockSpec((tm_eff, IN_FEATS), lambda i: (i, 0))]
    for w, b in params:
        in_specs.append(pl.BlockSpec(w.shape, lambda i: (0, 0)))
        in_specs.append(pl.BlockSpec(b.shape, lambda i: (0, 0)))

    return pl.pallas_call(
        dnn_kernel,
        out_shape=jax.ShapeDtypeStruct((n, OUT_FEATS), jnp.float32),
        grid=grid,
        in_specs=in_specs,
        out_specs=pl.BlockSpec((tm_eff, OUT_FEATS), lambda i: (i, 0)),
        compiler_params=pltpu.CompilerParams(
            dimension_semantics=("parallel",),
            vmem_limit_bytes=32 * 1024 * 1024,   # explicit: v5e default is 16 MiB
        ),
    )(x, *flat_args)


def reference_forward(x, params):
    """Pure-JAX reference using the same bf16 operands + f32 accumulation."""
    h = x.astype(jnp.bfloat16)
    for i, (w, b) in enumerate(params):
        h = jnp.dot(h, w, preferred_element_type=jnp.float32) + b
        if i < 3:
            h = jnp.maximum(h, 0.0).astype(jnp.bfloat16)
        else:
            h = jax.nn.sigmoid(h)
    return h


if __name__ == "__main__":
    key = jax.random.PRNGKey(0)
    kx, kp, kx2 = jax.random.split(key, 3)
    params = init_params(kp)

    # Small single-tile case.
    batch = 8
    x = jax.random.normal(kx, (batch, IN_FEATS), jnp.float32)
    out = jax.block_until_ready(dnn_forward(x, params))
    ref = reference_forward(x, params)
    assert out.shape == (batch, OUT_FEATS), out.shape
    assert jnp.allclose(out, ref, atol=2e-3, rtol=2e-3), "mismatch vs reference"

    # Multi-step grid with a ragged last tile (exercises cdiv grid + OOB-drop).
    batch2 = 50
    x2 = jax.random.normal(kx2, (batch2, IN_FEATS), jnp.float32)
    out2 = jax.block_until_ready(dnn_forward(x2, params))
    ref2 = reference_forward(x2, params)
    assert out2.shape == (batch2, OUT_FEATS), out2.shape
    assert jnp.allclose(out2, ref2, atol=2e-3, rtol=2e-3), "mismatch vs reference (ragged)"

    print("KERNEL_OK")
</pallas_src>

<mosaic_0001>
module attributes {stable_mosaic.version = 11 : i64} {
  func.func @dnn_kernel(%arg0: i32, %arg1: memref<8x360xf32, #tpu.memory_space<vmem>>, %arg2: memref<360x128xbf16, #tpu.memory_space<vmem>>, %arg3: memref<1x128xf32, #tpu.memory_space<vmem>>, %arg4: memref<128x128xbf16, #tpu.memory_space<vmem>>, %arg5: memref<1x128xf32, #tpu.memory_space<vmem>>, %arg6: memref<128x128xbf16, #tpu.memory_space<vmem>>, %arg7: memref<1x128xf32, #tpu.memory_space<vmem>>, %arg8: memref<128x60xbf16, #tpu.memory_space<vmem>>, %arg9: memref<1x60xf32, #tpu.memory_space<vmem>>, %arg10: memref<8x60xf32, #tpu.memory_space<vmem>>) attributes {dimension_semantics = [#tpu.dimension_semantics<parallel>], iteration_bounds = array<i64: 1>, scalar_prefetch = 0 : i64, scratch_operands = 0 : i64, tpu.core_type = #tpu.core_type<tc>, window_params = [{transform_indices = @transform_0, window_bounds = array<i64: 8, 360>}, {pipeline_mode = #tpu.pipeline_mode<synchronous>, transform_indices = @transform_1, window_bounds = array<i64: 360, 128>}, {pipeline_mode = #tpu.pipeline_mode<synchronous>, transform_indices = @transform_2, window_bounds = array<i64: 1, 128>}, {pipeline_mode = #tpu.pipeline_mode<synchronous>, transform_indices = @transform_3, window_bounds = array<i64: 128, 128>}, {pipeline_mode = #tpu.pipeline_mode<synchronous>, transform_indices = @transform_4, window_bounds = array<i64: 1, 128>}, {pipeline_mode = #tpu.pipeline_mode<synchronous>, transform_indices = @transform_5, window_bounds = array<i64: 128, 128>}, {pipeline_mode = #tpu.pipeline_mode<synchronous>, transform_indices = @transform_6, window_bounds = array<i64: 1, 128>}, {pipeline_mode = #tpu.pipeline_mode<synchronous>, transform_indices = @transform_7, window_bounds = array<i64: 128, 60>}, {pipeline_mode = #tpu.pipeline_mode<synchronous>, transform_indices = @transform_8, window_bounds = array<i64: 1, 60>}, {transform_indices = @transform_9, window_bounds = array<i64: 8, 60>}]} {
    %c0 = arith.constant 0 : index
    %c0_0 = arith.constant 0 : index
    %0 = vector.load %arg1[%c0, %c0_0] : memref<8x360xf32, #tpu.memory_space<vmem>>, vector<8x360xf32>
    %1 = arith.truncf %0 : vector<8x360xf32> to vector<8x360xbf16>
    %c0_1 = arith.constant 0 : index
    %c0_2 = arith.constant 0 : index
    %2 = vector.load %arg2[%c0_1, %c0_2] : memref<360x128xbf16, #tpu.memory_space<vmem>>, vector<360x128xbf16>
    %cst = arith.constant dense<0.000000e+00> : vector<8x128xf32>
    %3 = tpu.matmul %1, %2, %cst {dimension_numbers = #tpu.dot_dimension_numbers<[1], [0], [0], [1], [0, 0, 1, 1], [], []>} : vector<8x360xbf16>, vector<360x128xbf16>, vector<8x128xf32> -> vector<8x128xf32>
    %c0_3 = arith.constant 0 : index
    %c0_4 = arith.constant 0 : index
    %4 = vector.load %arg3[%c0_3, %c0_4] : memref<1x128xf32, #tpu.memory_space<vmem>>, vector<1x128xf32>
    %5 = vector.broadcast %4 : vector<1x128xf32> to vector<8x128xf32>
    %6 = arith.addf %3, %5 : vector<8x128xf32>
    %cst_5 = arith.constant 0.000000e+00 : f32
    %7 = vector.broadcast %cst_5 : f32 to vector<8x128xf32>
    %8 = arith.maximumf %6, %7 : vector<8x128xf32>
    %9 = arith.truncf %8 : vector<8x128xf32> to vector<8x128xbf16>
    %c0_6 = arith.constant 0 : index
    %c0_7 = arith.constant 0 : index
    %10 = vector.load %arg4[%c0_6, %c0_7] : memref<128x128xbf16, #tpu.memory_space<vmem>>, vector<128x128xbf16>
    %cst_8 = arith.constant dense<0.000000e+00> : vector<8x128xf32>
    %11 = tpu.matmul %9, %10, %cst_8 {dimension_numbers = #tpu.dot_dimension_numbers<[1], [0], [0], [1], [0, 0, 1, 1], [], []>} : vector<8x128xbf16>, vector<128x128xbf16>, vector<8x128xf32> -> vector<8x128xf32>
    %c0_9 = arith.constant 0 : index
    %c0_10 = arith.constant 0 : index
    %12 = vector.load %arg5[%c0_9, %c0_10] : memref<1x128xf32, #tpu.memory_space<vmem>>, vector<1x128xf32>
    %13 = vector.broadcast %12 : vector<1x128xf32> to vector<8x128xf32>
    %14 = arith.addf %11, %13 : vector<8x128xf32>
    %cst_11 = arith.constant 0.000000e+00 : f32
    %15 = vector.broadcast %cst_11 : f32 to vector<8x128xf32>
    %16 = arith.maximumf %14, %15 : vector<8x128xf32>
    %17 = arith.truncf %16 : vector<8x128xf32> to vector<8x128xbf16>
    %c0_12 = arith.constant 0 : index
    %c0_13 = arith.constant 0 : index
    %18 = vector.load %arg6[%c0_12, %c0_13] : memref<128x128xbf16, #tpu.memory_space<vmem>>, vector<128x128xbf16>
    %cst_14 = arith.constant dense<0.000000e+00> : vector<8x128xf32>
    %19 = tpu.matmul %17, %18, %cst_14 {dimension_numbers = #tpu.dot_dimension_numbers<[1], [0], [0], [1], [0, 0, 1, 1], [], []>} : vector<8x128xbf16>, vector<128x128xbf16>, vector<8x128xf32> -> vector<8x128xf32>
    %c0_15 = arith.constant 0 : index
    %c0_16 = arith.constant 0 : index
    %20 = vector.load %arg7[%c0_15, %c0_16] : memref<1x128xf32, #tpu.memory_space<vmem>>, vector<1x128xf32>
    %21 = vector.broadcast %20 : vector<1x128xf32> to vector<8x128xf32>
    %22 = arith.addf %19, %21 : vector<8x128xf32>
    %cst_17 = arith.constant 0.000000e+00 : f32
    %23 = vector.broadcast %cst_17 : f32 to vector<8x128xf32>
    %24 = arith.maximumf %22, %23 : vector<8x128xf32>
    %25 = arith.truncf %24 : vector<8x128xf32> to vector<8x128xbf16>
    %c0_18 = arith.constant 0 : index
    %c0_19 = arith.constant 0 : index
    %26 = vector.load %arg8[%c0_18, %c0_19] : memref<128x60xbf16, #tpu.memory_space<vmem>>, vector<128x60xbf16>
    %cst_20 = arith.constant dense<0.000000e+00> : vector<8x60xf32>
    %27 = tpu.matmul %25, %26, %cst_20 {dimension_numbers = #tpu.dot_dimension_numbers<[1], [0], [0], [1], [0, 0, 1, 1], [], []>} : vector<8x128xbf16>, vector<128x60xbf16>, vector<8x60xf32> -> vector<8x60xf32>
    %c0_21 = arith.constant 0 : index
    %c0_22 = arith.constant 0 : index
    %28 = vector.load %arg9[%c0_21, %c0_22] : memref<1x60xf32, #tpu.memory_space<vmem>>, vector<1x60xf32>
    %29 = vector.broadcast %28 : vector<1x60xf32> to vector<8x60xf32>
    %30 = arith.addf %27, %29 : vector<8x60xf32>
    %31 = arith.negf %30 : vector<8x60xf32>
    %32 = math.exp %31 : vector<8x60xf32>
    %cst_23 = arith.constant 1.000000e+00 : f32
    %33 = vector.broadcast %cst_23 : f32 to vector<8x60xf32>
    %34 = arith.addf %33, %32 : vector<8x60xf32>
    %35 = arith.divf %33, %34 : vector<8x60xf32>
    %c0_24 = arith.constant 0 : index
    %c0_25 = arith.constant 0 : index
    %36 = vector.load %arg10[%c0_24, %c0_25] : memref<8x60xf32, #tpu.memory_space<vmem>>, vector<8x60xf32>
    tpu.vector_store %arg10[%c0_24, %c0_25], %35 {strides = array<i32>} : memref<8x60xf32, #tpu.memory_space<vmem>>, vector<8x60xf32>,
    return
  }
  func.func @transform_0(%arg0: i32) -> (i32, i32) {
    %c0_i32 = arith.constant 0 : i32
    %c0_i32_0 = arith.constant 0 : i32
    return %arg0, %c0_i32 : i32, i32
  }
  func.func @transform_1(%arg0: i32) -> (i32, i32) {
    %c0_i32 = arith.constant 0 : i32
    %c0_i32_0 = arith.constant 0 : i32
    %c0_i32_1 = arith.constant 0 : i32
    return %c0_i32, %c0_i32_0 : i32, i32
  }
  func.func @transform_2(%arg0: i32) -> (i32, i32) {
    %c0_i32 = arith.constant 0 : i32
    %c0_i32_0 = arith.constant 0 : i32
    %c0_i32_1 = arith.constant 0 : i32
    return %c0_i32, %c0_i32_0 : i32, i32
  }
  func.func @transform_3(%arg0: i32) -> (i32, i32) {
    %c0_i32 = arith.constant 0 : i32
    %c0_i32_0 = arith.constant 0 : i32
    %c0_i32_1 = arith.constant 0 : i32
    return %c0_i32, %c0_i32_0 : i32, i32
  }
  func.func @transform_4(%arg0: i32) -> (i32, i32) {
    %c0_i32 = arith.constant 0 : i32
    %c0_i32_0 = arith.constant 0 : i32
    %c0_i32_1 = arith.constant 0 : i32
    return %c0_i32, %c0_i32_0 : i32, i32
  }
  func.func @transform_5(%arg0: i32) -> (i32, i32) {
    %c0_i32 = arith.constant 0 : i32
    %c0_i32_0 = arith.constant 0 : i32
    %c0_i32_1 = arith.constant 0 : i32
    return %c0_i32, %c0_i32_0 : i32, i32
  }
  func.func @transform_6(%arg0: i32) -> (i32, i32) {
    %c0_i32 = arith.constant 0 : i32
    %c0_i32_0 = arith.constant 0 : i32
    %c0_i32_1 = arith.constant 0 : i32
    return %c0_i32, %c0_i32_0 : i32, i32
  }
  func.func @transform_7(%arg0: i32) -> (i32, i32) {
    %c0_i32 = arith.constant 0 : i32
    %c0_i32_0 = arith.constant 0 : i32
    %c0_i32_1 = arith.constant 0 : i32
    return %c0_i32, %c0_i32_0 : i32, i32
  }
  func.func @transform_8(%arg0: i32) -> (i32, i32) {
    %c0_i32 = arith.constant 0 : i32
    %c0_i32_0 = arith.constant 0 : i32
    %c0_i32_1 = arith.constant 0 : i32
    return %c0_i32, %c0_i32_0 : i32, i32
  }
  func.func @transform_9(%arg0: i32) -> (i32, i32) {
    %c0_i32 = arith.constant 0 : i32
    %c0_i32_0 = arith.constant 0 : i32
    return %arg0, %c0_i32 : i32, i32
  }
}

</mosaic_0001>

<llo_original>
// kernel: tpu_custom_call.1
$region0: #{tpu_custom_call.1}
  #allocation0 [shape = 'u32[]', space=smem, size = 0x4, offset = 0x4, fixed_abs, tag = 'smem constant byte address 0x4 - core index']
  #allocation1 [shape = 'u32[144,128]{1,0:T(1,128)}', space=vmem, size = 0x12000, scoped, tag = 'internal scratch']
  %s0 = inlined_call_operand.vmem [shape: f32[8,360], index: 0, kind: input, shape index: {}]
  %s1 = inlined_call_operand.hbm [shape: bf16[360,128], index: 1, kind: input, shape index: {}]
  %s2 = inlined_call_operand.vmem [shape: f32[1,128], index: 2, kind: input, shape index: {}]
  %s3 = inlined_call_operand.vmem [shape: bf16[128,128], index: 3, kind: input, shape index: {}]
  %s4 = inlined_call_operand.vmem [shape: f32[1,128], index: 4, kind: input, shape index: {}]
  %s5 = inlined_call_operand.hbm [shape: bf16[128,128], index: 5, kind: input, shape index: {}]
  %s6 = inlined_call_operand.vmem [shape: f32[1,128], index: 6, kind: input, shape index: {}]
  %s7 = inlined_call_operand.vmem [shape: bf16[128,60], index: 7, kind: input, shape index: {}]
  %s8 = inlined_call_operand.vmem [shape: f32[1,60], index: 8, kind: input, shape index: {}]
  %s9 = inlined_call_operand.hbm [shape: f32[8,60], index: 9, kind: output, shape index: {}]
  %s10 = sld [smem:[#allocation0]]
  $region54: #{tpu_custom_call.1} parent=0
    _
  %s12 = ssub.s32 1, %s10
  %s13 = scalar_select 0, %s12, %s10
  $region1: #{tpu_custom_call.1} parent=0
    #allocation2 [shape = 'u8[92160]{0}', space=vmem, size = 0x16800, scoped, tag = 'input window, operand 1, single buffered']
    #allocation3 [shape = 's32[1]{0}', space=sflag, size = 0x4, scoped, tag = 'scoped memory for tpu_custom_call.1']
    #allocation4 [shape = 's32[1]{0}', space=sflag, size = 0x4, scoped, tag = 'scoped memory for tpu_custom_call.1']
    #allocation5 [shape = 'u8[32768]{0}', space=vmem, size = 0x8000, scoped, tag = 'input window, operand 5, single buffered']
    #allocation6 [shape = 's32[1]{0}', space=sflag, size = 0x4, scoped, tag = 'scoped memory for tpu_custom_call.1']
    #allocation7 [shape = 'u8[4096]{0}', space=vmem, size = 0x1000, scoped, tag = 'output window, operand 0, single buffered']
    %14 = vsyncpa [#allocation3], 0
    %15 = vsyncpa [#allocation6], 0
    %16 = vsyncpa [#allocation4], 0
    // Predicated region
    $region2: #{tpu_custom_call.1} parent=1 // pred_check
      _
    $region3: #{tpu_custom_call.1} parent=1 // pred_check_branch
      %18 = sbr.rel (0) target = $region5
    $region4: #{tpu_custom_call.1} parent=1 // pred_region
      _
    $region5: #{tpu_custom_call.1} parent=1 // pred_fallthru
      _
    // Predicated region
    $region6: #{tpu_custom_call.1} parent=1 // pred_check
      _
    $region7: #{tpu_custom_call.1} parent=1 // pred_check_branch
      %20 = sbr.rel (0) target = $region9
    $region8: #{tpu_custom_call.1} parent=1 // pred_region
      %s22 = ssub.s32 2880, 2880
      %23 = vsyncadd [#allocation3], %s22
      %s24 = sshll.u32 [#allocation2], 4
      %s25 = int_to_ptr.vmem [resolvable:$true] %s24
      %30 = dma.hbm_to_vmem [thread:$0]  %s1, 2880, %s25, [#allocation3], 64, 64, 4
    $region9: #{tpu_custom_call.1} parent=1 // pred_fallthru
      _
    // Predicated region
    $region10: #{tpu_custom_call.1} parent=1 // pred_check
      _
    $region11: #{tpu_custom_call.1} parent=1 // pred_check_branch
      %32 = sbr.rel (0) target = $region13
    $region12: #{tpu_custom_call.1} parent=1 // pred_region
      _
    $region13: #{tpu_custom_call.1} parent=1 // pred_fallthru
      _
    // Predicated region
    $region14: #{tpu_custom_call.1} parent=1 // pred_check
      _
    $region15: #{tpu_custom_call.1} parent=1 // pred_check_branch
      %34 = sbr.rel (0) target = $region17
    $region16: #{tpu_custom_call.1} parent=1 // pred_region
      _
    $region17: #{tpu_custom_call.1} parent=1 // pred_fallthru
      _
    // Predicated region
    $region18: #{tpu_custom_call.1} parent=1 // pred_check
      _
    $region19: #{tpu_custom_call.1} parent=1 // pred_check_branch
      %36 = sbr.rel (0) target = $region21
    $region20: #{tpu_custom_call.1} parent=1 // pred_region
      _
    $region21: #{tpu_custom_call.1} parent=1 // pred_fallthru
      _
    // Predicated region
    $region22: #{tpu_custom_call.1} parent=1 // pred_check
      _
    $region23: #{tpu_custom_call.1} parent=1 // pred_check_branch
      %38 = sbr.rel (0) target = $region25
    $region24: #{tpu_custom_call.1} parent=1 // pred_region
      %s40 = ssub.s32 1024, 1024
      %41 = vsyncadd [#allocation6], %s40
      %s42 = sshll.u32 [#allocation5], 4
      %s43 = int_to_ptr.vmem [resolvable:$true] %s42
      %48 = dma.hbm_to_vmem [thread:$0]  %s5, 1024, %s43, [#allocation6], 64, 64, 4
    $region25: #{tpu_custom_call.1} parent=1 // pred_fallthru
      _
    // Predicated region
    $region26: #{tpu_custom_call.1} parent=1 // pred_check
      _
    $region27: #{tpu_custom_call.1} parent=1 // pred_check_branch
      %50 = sbr.rel (0) target = $region29
    $region28: #{tpu_custom_call.1} parent=1 // pred_region
      _
    $region29: #{tpu_custom_call.1} parent=1 // pred_fallthru
      _
    // Predicated region
    $region30: #{tpu_custom_call.1} parent=1 // pred_check
      _
    $region31: #{tpu_custom_call.1} parent=1 // pred_check_branch
      %52 = sbr.rel (0) target = $region33
    $region32: #{tpu_custom_call.1} parent=1 // pred_region
      _
    $region33: #{tpu_custom_call.1} parent=1 // pred_fallthru
      _
    // Predicated region
    $region34: #{tpu_custom_call.1} parent=1 // pred_check
      _
    $region35: #{tpu_custom_call.1} parent=1 // pred_check_branch
      %54 = sbr.rel (0) target = $region37
    $region36: #{tpu_custom_call.1} parent=1 // pred_region
      _
    $region37: #{tpu_custom_call.1} parent=1 // pred_fallthru
      _
    // Predicated region
    $region38: #{tpu_custom_call.1} parent=1 // pred_check
      _
    $region39: #{tpu_custom_call.1} parent=1 // pred_check_branch
      %56 = sbr.rel (0) target = $region41
    $region40: #{tpu_custom_call.1} parent=1 // pred_region
      %57 = dma.done [#allocation3], 2880
    $region41: #{tpu_custom_call.1} parent=1 // pred_fallthru
      _
    // Predicated region
    $region42: #{tpu_custom_call.1} parent=1 // pred_check
      _
    $region43: #{tpu_custom_call.1} parent=1 // pred_check_branch
      %59 = sbr.rel (0) target = $region45
    $region44: #{tpu_custom_call.1} parent=1 // pred_region
      %60 = dma.done [#allocation6], 1024
    $region45: #{tpu_custom_call.1} parent=1 // pred_fallthru
      _
    %v62 = vld [vmem:[%s0] sm:$0xff]
    %v63 = vld [vmem:[%s0 + $0x8] sm:$0xff]
    %v64 = vld [vmem:[%s0 + $0x10] sm:$0xff]
    %v65 = vpack.c.bf16 %v62, %v62
    %v66 = vpack.c.bf16 %v63, %v63
    %v67 = vpack.c.bf16 %v64, %v64
    %v68 = vld [vmem:[#allocation2] sm:$0xf]
    %v69 = vld [vmem:[#allocation2 + $0x4] sm:$0xf]
    %v70 = vld [vmem:[#allocation2 + $0x8] sm:$0xf]
    %v71 = vld [vmem:[#allocation2 + $0xc] sm:$0xf]
    %v72 = vld [vmem:[#allocation2 + $0x10] sm:$0xf]
    %v73 = vld [vmem:[#allocation2 + $0x14] sm:$0xf]
    %v74 = vld [vmem:[#allocation2 + $0x18] sm:$0xf]
    %v75 = vld [vmem:[#allocation2 + $0x1c] sm:$0xf]
    %v76 = vld [vmem:[#allocation2 + $0x20] sm:$0xf]
    %v77 = vld [vmem:[#allocation2 + $0x24] sm:$0xf]
    %v78 = vld [vmem:[#allocation2 + $0x28] sm:$0xf]
    %v79 = vld [vmem:[#allocation2 + $0x2c] sm:$0xf]
    %v80 = vld [vmem:[#allocation2 + $0x30] sm:$0xf]
    %v81 = vld [vmem:[#allocation2 + $0x34] sm:$0xf]
    %v82 = vld [vmem:[#allocation2 + $0x38] sm:$0xf]
    %v83 = vld [vmem:[#allocation2 + $0x3c] sm:$0xf]
    %v84 = vld [vmem:[#allocation2 + $0x40] sm:$0xf]
    %v85 = vld [vmem:[#allocation2 + $0x44] sm:$0xf]
    %v86 = vld [vmem:[#allocation2 + $0x48] sm:$0xf]
    %v87 = vld [vmem:[#allocation2 + $0x4c] sm:$0xf]
    %v88 = vld [vmem:[#allocation2 + $0x50] sm:$0xf]
    %v89 = vld [vmem:[#allocation2 + $0x54] sm:$0xf]
    %v90 = vld [vmem:[#allocation2 + $0x58] sm:$0xf]
    %v91 = vld [vmem:[#allocation2 + $0x5c] sm:$0xf]
    %v92 = vld [vmem:[#allocation2 + $0x60] sm:$0xf]
    %v93 = vld [vmem:[#allocation2 + $0x64] sm:$0xf]
    %v94 = vld [vmem:[#allocation2 + $0x68] sm:$0xf]
    %v95 = vld [vmem:[#allocation2 + $0x6c] sm:$0xf]
    %v96 = vld [vmem:[#allocation2 + $0x70] sm:$0xf]
    %v97 = vld [vmem:[#allocation2 + $0x74] sm:$0xf]
    %v98 = vld [vmem:[#allocation2 + $0x78] sm:$0xf]
    %v99 = vld [vmem:[#allocation2 + $0x7c] sm:$0xf]
    %v100 = vld [vmem:[#allocation2 + $0x80] sm:$0xf]
    %v101 = vld [vmem:[#allocation2 + $0x84] sm:$0xf]
    %v102 = vld [vmem:[#allocation2 + $0x88] sm:$0xf]
    %v103 = vld [vmem:[#allocation2 + $0x8c] sm:$0xf]
    %v104 = vld [vmem:[#allocation2 + $0x90] sm:$0xf]
    %v105 = vld [vmem:[#allocation2 + $0x94] sm:$0xf]
    %v106 = vld [vmem:[#allocation2 + $0x98] sm:$0xf]
    %v107 = vld [vmem:[#allocation2 + $0x9c] sm:$0xf]
    %v108 = vld [vmem:[#allocation2 + $0xa0] sm:$0xf]
    %v109 = vld [vmem:[#allocation2 + $0xa4] sm:$0xf]
    %v110 = vld [vmem:[#allocation2 + $0xa8] sm:$0xf]
    %v111 = vld [vmem:[#allocation2 + $0xac] sm:$0xf]
    %v112 = vld [vmem:[#allocation2 + $0xb0] sm:$0xf]
    %v113 = vld [vmem:[%s2] sm:$0x1]
    %v115 = vlaneseq
    %v116 = vshrl.u32 %v115, 7
    %v117 = vsub.s32 0, %v116
    %v118 = vrot.slane %v113, %v117
    %v165 = vunpack.c.l.b16 %v68
    %v166 = vunpack.c.l.b16 %v69
    %v167 = vunpack.c.l.b16 %v70
    %v168 = vunpack.c.l.b16 %v71
    %v169 = vunpack.c.l.b16 %v72
    %v170 = vunpack.c.l.b16 %v73
    %v171 = vunpack.c.l.b16 %v74
    %v172 = vunpack.c.l.b16 %v75
    %v173 = vunpack.c.l.b16 %v76
    %v174 = vunpack.c.l.b16 %v77
    %v175 = vunpack.c.l.b16 %v78
    %v176 = vunpack.c.l.b16 %v79
    %v177 = vunpack.c.l.b16 %v80
    %v178 = vunpack.c.l.b16 %v81
    %v179 = vunpack.c.l.b16 %v82
    %v180 = vunpack.c.l.b16 %v83
    %v181 = vunpack.c.l.b16 %v84
    %v182 = vunpack.c.l.b16 %v85
    %v183 = vunpack.c.l.b16 %v86
    %v184 = vunpack.c.l.b16 %v87
    %v185 = vunpack.c.l.b16 %v88
    %v186 = vunpack.c.l.b16 %v89
    %v187 = vunpack.c.l.b16 %v90
    %v188 = vunpack.c.l.b16 %v91
    %v189 = vunpack.c.l.b16 %v92
    %v190 = vunpack.c.l.b16 %v93
    %v191 = vunpack.c.l.b16 %v94
    %v192 = vunpack.c.l.b16 %v95
    %v193 = vunpack.c.l.b16 %v96
    %v194 = vunpack.c.l.b16 %v97
    %v195 = vunpack.c.l.b16 %v98
    %v196 = vunpack.c.l.b16 %v99
    %v197 = vunpack.c.l.b16 %v100
    %v198 = vunpack.c.l.b16 %v101
    %v199 = vunpack.c.l.b16 %v102
    %v200 = vunpack.c.l.b16 %v103
    %v201 = vunpack.c.l.b16 %v104
    %v202 = vunpack.c.l.b16 %v105
    %v203 = vunpack.c.l.b16 %v106
    %v204 = vunpack.c.l.b16 %v107
    %v205 = vunpack.c.l.b16 %v108
    %v206 = vunpack.c.l.b16 %v109
    %v207 = vunpack.c.l.b16 %v110
    %v208 = vunpack.c.l.b16 %v111
    %v209 = vunpack.c.l.b16 %v112
    %v210 = vpack.c.b16 %v166, %v165
    %v211 = vpack.c.b16 %v168, %v167
    %v212 = vpack.c.b16 %v170, %v169
    %v213 = vpack.c.b16 %v172, %v171
    %v214 = vpack.c.b16 %v174, %v173
    %v215 = vpack.c.b16 %v176, %v175
    %v216 = vpack.c.b16 %v178, %v177
    %v217 = vpack.c.b16 %v180, %v179
    %v218 = vpack.c.b16 %v182, %v181
    %v219 = vpack.c.b16 %v184, %v183
    %v220 = vpack.c.b16 %v186, %v185
    %v221 = vpack.c.b16 %v188, %v187
    %v222 = vpack.c.b16 %v190, %v189
    %v223 = vpack.c.b16 %v192, %v191
    %v224 = vpack.c.b16 %v194, %v193
    %v225 = vpack.c.b16 %v196, %v195
    %v226 = vpack.c.b16 %v198, %v197
    %v227 = vpack.c.b16 %v200, %v199
    %v228 = vpack.c.b16 %v202, %v201
    %v229 = vpack.c.b16 %v204, %v203
    %v230 = vpack.c.b16 %v206, %v205
    %v231 = vpack.c.b16 %v208, %v207
    %v232 = vpack.c.b16 %v209, %v209
    %vm255 = vcmask 850944
    %v257 = vsel %vm255, %v67, 0
    %vm259 = vcmask 1043456
    %v261 = vsel %vm259, %v232, 0
    %263 = vmatprep.subr.bf16.mxu0 0
    %264 = vmatpush1.bf16.msra.mxu0 %v217
    %265 = vmatprep.subr.bf16.mxu0 0
    %266 = vmatpush1.bf16.msra.mxu0 %v216
    %267 = vmatprep.subr.bf16.mxu0 0
    %268 = vmatpush1.bf16.msra.mxu0 %v215
    %269 = vmatprep.subr.bf16.mxu0 0
    %270 = vmatpush1.bf16.msra.mxu0 %v214
    %271 = vmatprep.subr.bf16.mxu0 0
    %272 = vmatpush1.bf16.msra.mxu0 %v213
    %273 = vmatprep.subr.bf16.mxu0 0
    %274 = vmatpush1.bf16.msra.mxu0 %v212
    %275 = vmatprep.subr.bf16.mxu0 0
    %276 = vmatpush1.bf16.msra.mxu0 %v211
    %277 = vmatprep.subr.bf16.mxu0 0
    %278 = vmatpush1.bf16.msra.mxu0 %v210
    %279 = vmatprep.subr.bf16.mxu0 0
    %280 = vmatpush2.bf16.msra.mxu0 %v225
    %281 = vmatprep.subr.bf16.mxu0 0
    %282 = vmatpush2.bf16.msra.mxu0 %v224
    %283 = vmatprep.subr.bf16.mxu0 0
    %284 = vmatpush2.bf16.msra.mxu0 %v223
    %285 = vmatprep.subr.bf16.mxu0 0
    %286 = vmatpush2.bf16.msra.mxu0 %v222
    %287 = vmatprep.subr.bf16.mxu0 0
    %288 = vmatpush2.bf16.msra.mxu0 %v221
    %289 = vmatprep.subr.bf16.mxu0 0
    %290 = vmatpush2.bf16.msra.mxu0 %v220
    %291 = vmatprep.subr.bf16.mxu0 0
    %292 = vmatpush2.bf16.msra.mxu0 %v219
    %293 = vmatprep.subr.bf16.mxu0 0
    %294 = vmatpush2.bf16.msra.mxu0 %v218
    %295 = vmatprep.mubr.bf16.mxu0 %v66
    %296 = vmatmul.mubr.bf16.gmra.mxu0 %v65
    %v297 = vpop.f32.mrf.mxu0
    %v298 = vadd.f32 %v118, %v297
    %v299 = vpop.f32.mrf.mxu0
    %v300 = vpop.f32.mrf.mxu0
    %v301 = vpop.f32.mrf.mxu0
    %302 = vdwg.mxu0
    %303 = vmatprep.subr.bf16.mxu0 0
    %304 = vmatpush1.bf16.msra.mxu0 0
    %305 = vmatprep.subr.bf16.mxu0 0
    %306 = vmatpush1.bf16.msra.mxu0 %v261
    %307 = vmatprep.subr.bf16.mxu0 0
    %308 = vmatpush1.bf16.msra.mxu0 %v231
    %309 = vmatprep.subr.bf16.mxu0 0
    %310 = vmatpush1.bf16.msra.mxu0 %v230
    %311 = vmatprep.subr.bf16.mxu0 0
    %312 = vmatpush1.bf16.msra.mxu0 %v229
    %313 = vmatprep.subr.bf16.mxu0 0
    %314 = vmatpush1.bf16.msra.mxu0 %v228
    %315 = vmatprep.subr.bf16.mxu0 0
    %316 = vmatpush1.bf16.msra.mxu0 %v227
    %317 = vmatprep.subr.bf16.mxu0 0
    %318 = vmatpush1.bf16.msra.mxu0 %v226
    %319 = vmatprep.subr.bf16.mxu0 0
    %320 = vmatpush2.bf16.msra.mxu0 0
    %321 = vmatprep.subr.bf16.mxu0 0
    %322 = vmatpush2.bf16.msra.mxu0 0
    %323 = vmatprep.subr.bf16.mxu0 0
    %324 = vmatpush2.bf16.msra.mxu0 0
    %325 = vmatprep.subr.bf16.mxu0 0
    %326 = vmatpush2.bf16.msra.mxu0 0
    %327 = vmatprep.subr.bf16.mxu0 0
    %328 = vmatpush2.bf16.msra.mxu0 0
    %329 = vmatprep.subr.bf16.mxu0 0
    %330 = vmatpush2.bf16.msra.mxu0 0
    %331 = vmatprep.subr.bf16.mxu0 0
    %332 = vmatpush2.bf16.msra.mxu0 0
    %333 = vmatprep.subr.bf16.mxu0 0
    %334 = vmatpush2.bf16.msra.mxu0 0
    %335 = vmatprep.mubr.bf16.mxu0 0
    %336 = vmatmul.mubr.bf16.gmra.mxu0 %v257
    %v337 = vpop.f32.mrf.mxu0
    %v338 = vadd.f32 %v298, %v337
    %v339 = vpop.f32.mrf.mxu0
    %v340 = vpop.f32.mrf.mxu0
    %v341 = vpop.f32.mrf.mxu0
    %342 = vdwg.mxu0
    %v343 = vmax.f32 %v338, 0.0
    %v344 = vpack.c.bf16 %v343, %v343
    %v345 = vld [vmem:[%s3] sm:$0xf]
    %v346 = vld [vmem:[%s3 + $0x4] sm:$0xf]
    %v347 = vld [vmem:[%s3 + $0x8] sm:$0xf]
    %v348 = vld [vmem:[%s3 + $0xc] sm:$0xf]
    %v349 = vld [vmem:[%s3 + $0x10] sm:$0xf]
    %v350 = vld [vmem:[%s3 + $0x14] sm:$0xf]
    %v351 = vld [vmem:[%s3 + $0x18] sm:$0xf]
    %v352 = vld [vmem:[%s3 + $0x1c] sm:$0xf]
    %v353 = vld [vmem:[%s3 + $0x20] sm:$0xf]
    %v354 = vld [vmem:[%s3 + $0x24] sm:$0xf]
    %v355 = vld [vmem:[%s3 + $0x28] sm:$0xf]
    %v356 = vld [vmem:[%s3 + $0x2c] sm:$0xf]
    %v357 = vld [vmem:[%s3 + $0x30] sm:$0xf]
    %v358 = vld [vmem:[%s3 + $0x34] sm:$0xf]
    %v359 = vld [vmem:[%s3 + $0x38] sm:$0xf]
    %v360 = vld [vmem:[%s3 + $0x3c] sm:$0xf]
    %v361 = vld [vmem:[%s4] sm:$0x1]
    %v363 = vlaneseq
    %v364 = vshrl.u32 %v363, 7
    %v365 = vsub.s32 0, %v364
    %v366 = vrot.slane %v361, %v365
    %v384 = vunpack.c.l.b16 %v345
    %v385 = vunpack.c.l.b16 %v346
    %v386 = vunpack.c.l.b16 %v347
    %v387 = vunpack.c.l.b16 %v348
    %v388 = vunpack.c.l.b16 %v349
    %v389 = vunpack.c.l.b16 %v350
    %v390 = vunpack.c.l.b16 %v351
    %v391 = vunpack.c.l.b16 %v352
    %v392 = vunpack.c.l.b16 %v353
    %v393 = vunpack.c.l.b16 %v354
    %v394 = vunpack.c.l.b16 %v355
    %v395 = vunpack.c.l.b16 %v356
    %v396 = vunpack.c.l.b16 %v357
    %v397 = vunpack.c.l.b16 %v358
    %v398 = vunpack.c.l.b16 %v359
    %v399 = vunpack.c.l.b16 %v360
    %v400 = vpack.c.b16 %v385, %v384
    %v401 = vpack.c.b16 %v387, %v386
    %v402 = vpack.c.b16 %v389, %v388
    %v403 = vpack.c.b16 %v391, %v390
    %v404 = vpack.c.b16 %v393, %v392
    %v405 = vpack.c.b16 %v395, %v394
    %v406 = vpack.c.b16 %v397, %v396
    %v407 = vpack.c.b16 %v399, %v398
    %416 = vmatprep.subr.bf16.mxu0 0
    %417 = vmatpush1.bf16.msra.mxu0 %v407
    %418 = vmatprep.subr.bf16.mxu0 0
    %419 = vmatpush1.bf16.msra.mxu0 %v406
    %420 = vmatprep.subr.bf16.mxu0 0
    %421 = vmatpush1.bf16.msra.mxu0 %v405
    %422 = vmatprep.subr.bf16.mxu0 0
    %423 = vmatpush1.bf16.msra.mxu0 %v404
    %424 = vmatprep.subr.bf16.mxu0 0
    %425 = vmatpush1.bf16.msra.mxu0 %v403
    %426 = vmatprep.subr.bf16.mxu0 0
    %427 = vmatpush1.bf16.msra.mxu0 %v402
    %428 = vmatprep.subr.bf16.mxu0 0
    %429 = vmatpush1.bf16.msra.mxu0 %v401
    %430 = vmatprep.subr.bf16.mxu0 0
    %431 = vmatpush1.bf16.msra.mxu0 %v400
    %432 = vmatprep.subr.bf16.mxu0 0
    %433 = vmatpush2.bf16.msra.mxu0 0
    %434 = vmatprep.subr.bf16.mxu0 0
    %435 = vmatpush2.bf16.msra.mxu0 0
    %436 = vmatprep.subr.bf16.mxu0 0
    %437 = vmatpush2.bf16.msra.mxu0 0
    %438 = vmatprep.subr.bf16.mxu0 0
    %439 = vmatpush2.bf16.msra.mxu0 0
    %440 = vmatprep.subr.bf16.mxu0 0
    %441 = vmatpush2.bf16.msra.mxu0 0
    %442 = vmatprep.subr.bf16.mxu0 0
    %443 = vmatpush2.bf16.msra.mxu0 0
    %444 = vmatprep.subr.bf16.mxu0 0
    %445 = vmatpush2.bf16.msra.mxu0 0
    %446 = vmatprep.subr.bf16.mxu0 0
    %447 = vmatpush2.bf16.msra.mxu0 0
    %448 = vmatprep.mubr.bf16.mxu0 0
    %449 = vmatmul.mubr.bf16.gmra.mxu0 %v344
    %v450 = vpop.f32.mrf.mxu0
    %v451 = vadd.f32 %v366, %v450
    %v452 = vpop.f32.mrf.mxu0
    %v453 = vpop.f32.mrf.mxu0
    %v454 = vpop.f32.mrf.mxu0
    %455 = vdwg.mxu0
    %v456 = vmax.f32 %v451, 0.0
    %v457 = vpack.c.bf16 %v456, %v456
    %v458 = vld [vmem:[#allocation5] sm:$0xf]
    %v459 = vld [vmem:[#allocation5 + $0x4] sm:$0xf]
    %v460 = vld [vmem:[#allocation5 + $0x8] sm:$0xf]
    %v461 = vld [vmem:[#allocation5 + $0xc] sm:$0xf]
    %v462 = vld [vmem:[#allocation5 + $0x10] sm:$0xf]
    %v463 = vld [vmem:[#allocation5 + $0x14] sm:$0xf]
    %v464 = vld [vmem:[#allocation5 + $0x18] sm:$0xf]
    %v465 = vld [vmem:[#allocation5 + $0x1c] sm:$0xf]
    %v466 = vld [vmem:[#allocation5 + $0x20] sm:$0xf]
    %v467 = vld [vmem:[#allocation5 + $0x24] sm:$0xf]
    %v468 = vld [vmem:[#allocation5 + $0x28] sm:$0xf]
    %v469 = vld [vmem:[#allocation5 + $0x2c] sm:$0xf]
    %v470 = vld [vmem:[#allocation5 + $0x30] sm:$0xf]
    %v471 = vld [vmem:[#allocation5 + $0x34] sm:$0xf]
    %v472 = vld [vmem:[#allocation5 + $0x38] sm:$0xf]
    %v473 = vld [vmem:[#allocation5 + $0x3c] sm:$0xf]
    %v474 = vld [vmem:[%s6] sm:$0x1]
    %v476 = vlaneseq
    %v477 = vshrl.u32 %v476, 7
    %v478 = vsub.s32 0, %v477
    %v479 = vrot.slane %v474, %v478
    %v497 = vunpack.c.l.b16 %v458
    %v498 = vunpack.c.l.b16 %v459
    %v499 = vunpack.c.l.b16 %v460
    %v500 = vunpack.c.l.b16 %v461
    %v501 = vunpack.c.l.b16 %v462
    %v502 = vunpack.c.l.b16 %v463
    %v503 = vunpack.c.l.b16 %v464
    %v504 = vunpack.c.l.b16 %v465
    %v505 = vunpack.c.l.b16 %v466
    %v506 = vunpack.c.l.b16 %v467
    %v507 = vunpack.c.l.b16 %v468
    %v508 = vunpack.c.l.b16 %v469
    %v509 = vunpack.c.l.b16 %v470
    %v510 = vunpack.c.l.b16 %v471
    %v511 = vunpack.c.l.b16 %v472
    %v512 = vunpack.c.l.b16 %v473
    %v513 = vpack.c.b16 %v498, %v497
    %v514 = vpack.c.b16 %v500, %v499
    %v515 = vpack.c.b16 %v502, %v501
    %v516 = vpack.c.b16 %v504, %v503
    %v517 = vpack.c.b16 %v506, %v505
    %v518 = vpack.c.b16 %v508, %v507
    %v519 = vpack.c.b16 %v510, %v509
    %v520 = vpack.c.b16 %v512, %v511
    %529 = vmatprep.subr.bf16.mxu0 0
    %530 = vmatpush1.bf16.msra.mxu0 %v520
    %531 = vmatprep.subr.bf16.mxu0 0
    %532 = vmatpush1.bf16.msra.mxu0 %v519
    %533 = vmatprep.subr.bf16.mxu0 0
    %534 = vmatpush1.bf16.msra.mxu0 %v518
    %535 = vmatprep.subr.bf16.mxu0 0
    %536 = vmatpush1.bf16.msra.mxu0 %v517
    %537 = vmatprep.subr.bf16.mxu0 0
    %538 = vmatpush1.bf16.msra.mxu0 %v516
    %539 = vmatprep.subr.bf16.mxu0 0
    %540 = vmatpush1.bf16.msra.mxu0 %v515
    %541 = vmatprep.subr.bf16.mxu0 0
    %542 = vmatpush1.bf16.msra.mxu0 %v514
    %543 = vmatprep.subr.bf16.mxu0 0
    %544 = vmatpush1.bf16.msra.mxu0 %v513
    %545 = vmatprep.subr.bf16.mxu0 0
    %546 = vmatpush2.bf16.msra.mxu0 0
    %547 = vmatprep.subr.bf16.mxu0 0
    %548 = vmatpush2.bf16.msra.mxu0 0
    %549 = vmatprep.subr.bf16.mxu0 0
    %550 = vmatpush2.bf16.msra.mxu0 0
    %551 = vmatprep.subr.bf16.mxu0 0
    %552 = vmatpush2.bf16.msra.mxu0 0
    %553 = vmatprep.subr.bf16.mxu0 0
    %554 = vmatpush2.bf16.msra.mxu0 0
    %555 = vmatprep.subr.bf16.mxu0 0
    %556 = vmatpush2.bf16.msra.mxu0 0
    %557 = vmatprep.subr.bf16.mxu0 0
    %558 = vmatpush2.bf16.msra.mxu0 0
    %559 = vmatprep.subr.bf16.mxu0 0
    %560 = vmatpush2.bf16.msra.mxu0 0
    %561 = vmatprep.mubr.bf16.mxu0 0
    %562 = vmatmul.mubr.bf16.gmra.mxu0 %v457
    %v563 = vpop.f32.mrf.mxu0
    %v564 = vadd.f32 %v479, %v563
    %v565 = vpop.f32.mrf.mxu0
    %v566 = vpop.f32.mrf.mxu0
    %v567 = vpop.f32.mrf.mxu0
    %568 = vdwg.mxu0
    %v569 = vmax.f32 %v564, 0.0
    %v570 = vpack.c.bf16 %v569, %v569
    %v571 = vld [vmem:[%s7] sm:$0xf]
    %v572 = vld [vmem:[%s7 + $0x4] sm:$0xf]
    %v573 = vld [vmem:[%s7 + $0x8] sm:$0xf]
    %v574 = vld [vmem:[%s7 + $0xc] sm:$0xf]
    %v575 = vld [vmem:[%s7 + $0x10] sm:$0xf]
    %v576 = vld [vmem:[%s7 + $0x14] sm:$0xf]
    %v577 = vld [vmem:[%s7 + $0x18] sm:$0xf]
    %v578 = vld [vmem:[%s7 + $0x1c] sm:$0xf]
    %v579 = vld [vmem:[%s7 + $0x20] sm:$0xf]
    %v580 = vld [vmem:[%s7 + $0x24] sm:$0xf]
    %v581 = vld [vmem:[%s7 + $0x28] sm:$0xf]
    %v582 = vld [vmem:[%s7 + $0x2c] sm:$0xf]
    %v583 = vld [vmem:[%s7 + $0x30] sm:$0xf]
    %v584 = vld [vmem:[%s7 + $0x34] sm:$0xf]
    %v585 = vld [vmem:[%s7 + $0x38] sm:$0xf]
    %v586 = vld [vmem:[%s7 + $0x3c] sm:$0xf]
    %v587 = vld [vmem:[%s8] sm:$0x1]
    %v589 = vlaneseq
    %v590 = vshrl.u32 %v589, 7
    %v591 = vsub.s32 0, %v590
    %v592 = vrot.slane %v587, %v591
    %v610 = vunpack.c.l.b16 %v571
    %v611 = vunpack.c.l.b16 %v572
    %v612 = vunpack.c.l.b16 %v573
    %v613 = vunpack.c.l.b16 %v574
    %v614 = vunpack.c.l.b16 %v575
    %v615 = vunpack.c.l.b16 %v576
    %v616 = vunpack.c.l.b16 %v577
    %v617 = vunpack.c.l.b16 %v578
    %v618 = vunpack.c.l.b16 %v579
    %v619 = vunpack.c.l.b16 %v580
    %v620 = vunpack.c.l.b16 %v581
    %v621 = vunpack.c.l.b16 %v582
    %v622 = vunpack.c.l.b16 %v583
    %v623 = vunpack.c.l.b16 %v584
    %v624 = vunpack.c.l.b16 %v585
    %v625 = vunpack.c.l.b16 %v586
    %v626 = vpack.c.b16 %v611, %v610
    %v627 = vpack.c.b16 %v613, %v612
    %v628 = vpack.c.b16 %v615, %v614
    %v629 = vpack.c.b16 %v617, %v616
    %v630 = vpack.c.b16 %v619, %v618
    %v631 = vpack.c.b16 %v621, %v620
    %v632 = vpack.c.b16 %v623, %v622
    %v633 = vpack.c.b16 %v625, %v624
    %642 = vmatprep.subr.bf16.mxu0 0
    %643 = vmatpush1.bf16.msra.mxu0 %v633
    %644 = vmatprep.subr.bf16.mxu0 0
    %645 = vmatpush1.bf16.msra.mxu0 %v632
    %646 = vmatprep.subr.bf16.mxu0 0
    %647 = vmatpush1.bf16.msra.mxu0 %v631
    %648 = vmatprep.subr.bf16.mxu0 0
    %649 = vmatpush1.bf16.msra.mxu0 %v630
    %650 = vmatprep.subr.bf16.mxu0 0
    %651 = vmatpush1.bf16.msra.mxu0 %v629
    %652 = vmatprep.subr.bf16.mxu0 0
    %653 = vmatpush1.bf16.msra.mxu0 %v628
    %654 = vmatprep.subr.bf16.mxu0 0
    %655 = vmatpush1.bf16.msra.mxu0 %v627
    %656 = vmatprep.subr.bf16.mxu0 0
    %657 = vmatpush1.bf16.msra.mxu0 %v626
    %658 = vmatprep.subr.bf16.mxu0 0
    %659 = vmatpush2.bf16.msra.mxu0 0
    %660 = vmatprep.subr.bf16.mxu0 0
    %661 = vmatpush2.bf16.msra.mxu0 0
    %662 = vmatprep.subr.bf16.mxu0 0
    %663 = vmatpush2.bf16.msra.mxu0 0
    %664 = vmatprep.subr.bf16.mxu0 0
    %665 = vmatpush2.bf16.msra.mxu0 0
    %666 = vmatprep.subr.bf16.mxu0 0
    %667 = vmatpush2.bf16.msra.mxu0 0
    %668 = vmatprep.subr.bf16.mxu0 0
    %669 = vmatpush2.bf16.msra.mxu0 0
    %670 = vmatprep.subr.bf16.mxu0 0
    %671 = vmatpush2.bf16.msra.mxu0 0
    %672 = vmatprep.subr.bf16.mxu0 0
    %673 = vmatpush2.bf16.msra.mxu0 0
    %674 = vmatprep.mubr.bf16.mxu0 0
    %675 = vmatmul.mubr.bf16.gmra.mxu0 %v570
    %v676 = vpop.f32.mrf.mxu0
    %v677 = vadd.f32 %v592, %v676
    %v678 = vpop.f32.mrf.mxu0
    %v679 = vpop.f32.mrf.mxu0
    %v680 = vpop.f32.mrf.mxu0
    %681 = vdwg.mxu0
    %v682 = vxor.u32 %v677, 2147483648
    %v683 = vmul.f32 %v682, 1.442695
    %v684 = vpow.pop %v683
    %v685 = vadd.f32 %v684, 1.0
    %v686 = vrcp.pop %v685
    %v687 = vmul.f32 1.0, %v686
    %vm688 = vcmask 490496
    %689 = vst.msk [vmem:[#allocation7] sm:$0xff] %vm688, %v687
    // Predicated region
    $region46: #{tpu_custom_call.1} parent=1 // pred_check
      _
    $region47: #{tpu_custom_call.1} parent=1 // pred_check_branch
      %691 = sbr.rel (0) target = $region49
    $region48: #{tpu_custom_call.1} parent=1 // pred_region
      %s693 = ssub.s32 128, 128
      %694 = vsyncadd [#allocation4], %s693
      %s696 = sshll.u32 [#allocation7], 4
      %s697 = int_to_ptr.vmem [resolvable:$true] %s696
      %699 = dma.vmem_to_hbm [thread:$0]  %s697, 128, %s9, [#allocation4]
    $region49: #{tpu_custom_call.1} parent=1 // pred_fallthru
      _
    // Predicated region
    $region50: #{tpu_custom_call.1} parent=1 // pred_check
      _
    $region51: #{tpu_custom_call.1} parent=1 // pred_check_branch
      %701 = sbr.rel (0) target = $region53
    $region52: #{tpu_custom_call.1} parent=1 // pred_region
      %702 = dma.done [#allocation4], 128
    $region53: #{tpu_custom_call.1} parent=1 // pred_fallthru
      _
    %703 = vsyncpa [#allocation3], 1
    %704 = vsyncpa [#allocation6], 1
    %705 = vsyncpa [#allocation4], 1

</llo_original>
